<compile_context>
chip_gen: v7x
topology: tpu7x:2x2x1
jax: 0.10.0
libtpu: 0.0.40
codegen_flags: <defaults>
</compile_context>

<pallas_src>
import functools

import jax
import jax.numpy as jnp
from jax.experimental import pallas as pl
from jax.experimental.pallas import tpu as pltpu


def _choose_tile_n(n):
    # Large row tiles fill the MXU M-dimension (128 on v5e, 256 on v6e/v7x) and
    # amortize the ~0.35 us per-grid-step pipeline overhead. 128-multiples keep
    # every output slab lane-dense.
    for cand in (1024, 512, 256, 128):
        if n >= cand:
            return cand
    return 128  # tiny inputs: pad up to one 128-row tile


def _vq_kernel(n_valid, z_ref, e_ref, esq_ref, zq_ref, idx_ref, cnt_ref, err_ref):
    i = pl.program_id(0)

    z = z_ref[...].astype(jnp.float32)          # (tN, D)
    e = e_ref[...].astype(jnp.float32)          # (K, D)  codebook, resident block
    e_sq = esq_ref[...]                         # (1, K)  hoisted ||e||^2 (f32)

    tN = z.shape[0]
    K = e.shape[0]

    # argmin_k ||z - e_k||^2 == argmin_k (||e_k||^2 - 2 z.e_k); the per-row
    # ||z||^2 constant is dropped.  The cross term runs on the MXU with bf16
    # inputs (native on all generations) and an f32 accumulator; the nearest-
    # neighbour decision is robust to bf16 rounding.
    cross = jax.lax.dot_general(
        z.astype(jnp.bfloat16), e.astype(jnp.bfloat16),
        dimension_numbers=(((1,), (1,)), ((), ())),
        preferred_element_type=jnp.float32,
    )                                           # (tN, K)
    d = e_sq - 2.0 * cross                      # (tN, K)

    idx = jnp.argmin(d, axis=1).astype(jnp.int32)            # (tN,)

    # One-hot encodings live only in VMEM (never written back to HBM).
    col = jax.lax.broadcasted_iota(jnp.int32, (tN, K), 1)
    enc = (col == idx[:, None]).astype(jnp.float32)          # (tN, K)

    # Exact codebook rows: f32 one-hot @ f32 codebook on the MXU.
    # TODO(synk): for K >> D an in-kernel gather of the resident codebook would
    # skip this second MXU pass; kept as a matmul for lowering robustness.
    z_q = jnp.dot(enc, e, preferred_element_type=jnp.float32)  # (tN, D)

    # Mask padded tail rows out of the fused reductions.
    row = jax.lax.broadcasted_iota(jnp.int32, (tN, 1), 0)
    validf = ((i * tN + row) < n_valid).astype(jnp.float32)   # (tN, 1)

    zq_ref[...] = z_q.astype(zq_ref.dtype)
    idx_ref[...] = idx[None, :]                                # lane-dense (1, tN)
    cnt_ref[...] = jnp.sum(enc * validf, axis=0, keepdims=True)  # (1, K) f32 usage
    err = jnp.sum(((z_q - z) ** 2) * validf)                     # scalar, f32
    err_ref[...] = jnp.full((1, 128), err, dtype=jnp.float32)


def _vq_pallas(z_flat, embedding, *, tile_n):
    """Returns (z_q (N,D), idx (N,), counts (K,) f32, sum((z_q-z)^2) scalar f32)."""
    N, D = z_flat.shape
    K = embedding.shape[0]
    num_tiles = (N + tile_n - 1) // tile_n
    Np = num_tiles * tile_n
    if Np != N:
        z_flat = jnp.pad(z_flat, ((0, Np - N), (0, 0)))

    # Hoisted ||e||^2 — computed once, passed as a (1, K) input.
    e_sq = jnp.sum(embedding.astype(jnp.float32) ** 2, axis=1)[None, :]

    kernel = functools.partial(_vq_kernel, N)
    out_shapes = (
        jax.ShapeDtypeStruct((Np, D), z_flat.dtype),           # z_q
        jax.ShapeDtypeStruct((num_tiles, tile_n), jnp.int32),  # indices (lane-dense)
        jax.ShapeDtypeStruct((num_tiles, K), jnp.float32),     # per-tile usage counts
        jax.ShapeDtypeStruct((num_tiles, 128), jnp.float32),   # per-tile sq-error
    )

    zq_p, idx_t, cnt_t, err_t = pl.pallas_call(
        kernel,
        out_shape=out_shapes,
        grid_spec=pltpu.PrefetchScalarGridSpec(
            num_scalar_prefetch=0,
            grid=(num_tiles,),
            in_specs=[
                pl.BlockSpec((tile_n, D), lambda i: (i, 0)),   # z row tile
                pl.BlockSpec((K, D), lambda i: (0, 0)),        # resident codebook
                pl.BlockSpec((1, K), lambda i: (0, 0)),        # resident ||e||^2
            ],
            out_specs=[
                pl.BlockSpec((tile_n, D), lambda i: (i, 0)),
                pl.BlockSpec((1, tile_n), lambda i: (i, 0)),
                pl.BlockSpec((1, K), lambda i: (i, 0)),
                pl.BlockSpec((1, 128), lambda i: (i, 0)),
            ],
        ),
        compiler_params=pltpu.CompilerParams(
            dimension_semantics=("parallel",),                 # independent row tiles
            vmem_limit_bytes=48 * 1024 * 1024,                 # safe on v5e/v6e/v7x
        ),
    )(z_flat, embedding, e_sq)

    zq = zq_p[:N] if Np != N else zq_p
    idx = idx_t.reshape(-1)[:N]
    counts = jnp.sum(cnt_t, axis=0)          # (K,) f32
    sq_err = jnp.sum(err_t[:, 0])            # scalar f32
    return zq, idx, counts, sq_err


class VectorQuantizerPallas:
    """JAX/Pallas re-implementation of the torch VectorQuantizer forward."""

    def __init__(self, n_embed, embed_dim, beta, key):
        self.n_embed = n_embed
        self.embed_dim = embed_dim
        self.beta = beta
        # nn.Embedding weight init: uniform(-1/n_embed, 1/n_embed), deterministic.
        self.embedding = jax.random.uniform(
            key, (n_embed, embed_dim), dtype=jnp.float32,
            minval=-1.0 / n_embed, maxval=1.0 / n_embed,
        )

    @functools.partial(jax.jit, static_argnums=0)
    def __call__(self, z):
        # z: (B, C, H, W) NCHW, C == embed_dim (matches the torch module input).
        B, C, H, W = z.shape
        assert C == self.embed_dim

        z_nhwc = jnp.transpose(z, (0, 2, 3, 1))            # (B, H, W, C)
        z_flat = z_nhwc.reshape(-1, self.embed_dim)        # (N, C)
        N = z_flat.shape[0]
        tile_n = _choose_tile_n(N)

        zq_flat, idx, counts, sq_err = _vq_pallas(
            z_flat, self.embedding, tile_n=tile_n)

        z_q = zq_flat.reshape(B, H, W, C)

        # Forward value: ||sg[z_q]-z||^2 + beta*||z_q-sg[z]||^2 == (1+beta)*mean((z_q-z)^2).
        # TODO(synk): no custom_vjp is defined for the pallas_call, so gradients do
        # not flow into the codebook through the kernel; forward-pass parity only.
        loss = (1.0 + self.beta) * sq_err / (N * self.embed_dim)

        # Straight-through estimator (forward value == z_q).
        z_q = z_nhwc + jax.lax.stop_gradient(z_q - z_nhwc)

        # Perplexity from the in-kernel f32 usage counts (no (N,K) re-read).
        e_mean = counts / N
        perplexity = jnp.exp(-jnp.sum(e_mean * jnp.log(e_mean + 1e-10)))

        # API-parity outputs only (not on the hot path): one-hot in z.dtype like torch.
        min_encoding = jax.nn.one_hot(idx, self.n_embed, dtype=z.dtype)
        min_encoding_indices = idx[:, None]

        z_q = jnp.transpose(z_q, (0, 3, 1, 2))             # back to NCHW
        return z_q, loss, (perplexity, min_encoding, min_encoding_indices)


if __name__ == "__main__":
    key = jax.random.PRNGKey(0)
    k_embed, k_z1, k_z2 = jax.random.split(key, 3)

    n_embed = 256
    embed_dim = 128
    beta = 0.25

    vq = VectorQuantizerPallas(n_embed, embed_dim, beta, k_embed)

    def check(z):
        B, C, H, W = z.shape
        N = B * H * W
        z_q, loss, (perplexity, min_encoding, min_encoding_indices) = vq(z)
        jax.block_until_ready((z_q, loss, perplexity, min_encoding,
                               min_encoding_indices))

        assert z_q.shape == (B, C, H, W)
        assert min_encoding.shape == (N, n_embed)
        assert min_encoding_indices.shape == (N, 1)

        # Pure-JAX reference distances (f32).
        z_nhwc = jnp.transpose(z, (0, 2, 3, 1)).reshape(-1, embed_dim)
        d_ref = (jnp.sum(z_nhwc ** 2, axis=1, keepdims=True)
                 + jnp.sum(vq.embedding ** 2, axis=1)[None, :]
                 - 2.0 * z_nhwc @ vq.embedding.T)
        idx = min_encoding_indices[:, 0]

        # Chosen codes must be (near-)optimal; the bf16 cross matmul can only
        # flip effectively tied candidates.
        d_chosen = jnp.take_along_axis(d_ref, idx[:, None], axis=1)[:, 0]
        assert bool(jnp.all(d_chosen <= d_ref.min(axis=1) + 5e-4))

        # z_q (after straight-through) equals the exact codebook rows.
        zq_ref = vq.embedding[idx].reshape(B, H, W, embed_dim).transpose(0, 3, 1, 2)
        assert bool(jnp.allclose(z_q, zq_ref, atol=1e-5))

        # Fused loss / perplexity match a recomputation from the kernel's indices.
        loss_ref = (1.0 + beta) * jnp.mean((vq.embedding[idx] - z_nhwc) ** 2)
        assert bool(jnp.allclose(loss, loss_ref, rtol=1e-4, atol=1e-7))
        counts_ref = jnp.bincount(idx, length=n_embed).astype(jnp.float32)
        e_mean_ref = counts_ref / N
        perp_ref = jnp.exp(-jnp.sum(e_mean_ref * jnp.log(e_mean_ref + 1e-10)))
        assert bool(jnp.allclose(perplexity, perp_ref, rtol=1e-4))
        assert bool(jnp.all(min_encoding.argmax(axis=1) == idx))

    # Aligned case: N = 2*8*8 = 128 (exactly one 128-row tile).
    z1 = jax.random.normal(k_z1, (2, embed_dim, 8, 8), dtype=jnp.float32) * 0.05
    check(z1)

    # Ragged case: N = 1*6*6 = 36 -> padded to a 128-row tile, tail masked.
    z2 = jax.random.normal(k_z2, (1, embed_dim, 6, 6), dtype=jnp.float32) * 0.05
    check(z2)

    print("KERNEL_OK")
</pallas_src>

<mosaic_0001>
module attributes {stable_mosaic.version = 11 : i64} {
  func.func @_vq_kernel(%arg0: i32, %arg1: memref<128x128xf32, #tpu.memory_space<vmem>>, %arg2: memref<256x128xf32, #tpu.memory_space<vmem>>, %arg3: memref<1x256xf32, #tpu.memory_space<vmem>>, %arg4: memref<128x128xf32, #tpu.memory_space<vmem>>, %arg5: memref<1x128xi32, #tpu.memory_space<vmem>>, %arg6: memref<1x256xf32, #tpu.memory_space<vmem>>, %arg7: memref<1x128xf32, #tpu.memory_space<vmem>>) attributes {dimension_semantics = [#tpu.dimension_semantics<parallel>], iteration_bounds = array<i64: 1>, scalar_prefetch = 0 : i64, scratch_operands = 0 : i64, tpu.core_type = #tpu.core_type<tc>, window_params = [{transform_indices = @transform_0, window_bounds = array<i64: 128, 128>}, {pipeline_mode = #tpu.pipeline_mode<synchronous>, transform_indices = @transform_1, window_bounds = array<i64: 256, 128>}, {pipeline_mode = #tpu.pipeline_mode<synchronous>, transform_indices = @transform_2, window_bounds = array<i64: 1, 256>}, {transform_indices = @transform_3, window_bounds = array<i64: 128, 128>}, {transform_indices = @transform_4, window_bounds = array<i64: 1, 128>}, {transform_indices = @transform_5, window_bounds = array<i64: 1, 256>}, {transform_indices = @transform_6, window_bounds = array<i64: 1, 128>}]} {
    %c0 = arith.constant 0 : index
    %c0_0 = arith.constant 0 : index
    %0 = vector.load %arg1[%c0, %c0_0] : memref<128x128xf32, #tpu.memory_space<vmem>>, vector<128x128xf32>
    %c0_1 = arith.constant 0 : index
    %c0_2 = arith.constant 0 : index
    %1 = vector.load %arg2[%c0_1, %c0_2] : memref<256x128xf32, #tpu.memory_space<vmem>>, vector<256x128xf32>
    %c0_3 = arith.constant 0 : index
    %c0_4 = arith.constant 0 : index
    %2 = vector.load %arg3[%c0_3, %c0_4] : memref<1x256xf32, #tpu.memory_space<vmem>>, vector<1x256xf32>
    %3 = arith.truncf %0 : vector<128x128xf32> to vector<128x128xbf16>
    %4 = arith.truncf %1 : vector<256x128xf32> to vector<256x128xbf16>
    %cst = arith.constant dense<0.000000e+00> : vector<128x256xf32>
    %5 = tpu.matmul %3, %4, %cst {dimension_numbers = #tpu.dot_dimension_numbers<[1], [1], [0], [0], [0, 0, 1, 0], [], []>} : vector<128x128xbf16>, vector<256x128xbf16>, vector<128x256xf32> -> vector<128x256xf32>
    %cst_5 = arith.constant 2.000000e+00 : f32
    %6 = vector.broadcast %cst_5 : f32 to vector<128x256xf32>
    %7 = arith.mulf %6, %5 : vector<128x256xf32>
    %8 = vector.broadcast %2 : vector<1x256xf32> to vector<128x256xf32>
    %9 = arith.subf %8, %7 : vector<128x256xf32>
    %10 = tpu.reduce_index %9 {axis = 1 : i32, kind = #tpu.reduction_kind<arg_min>} : vector<128x256xf32> -> vector<128xi32>
    %11 = tpu.iota {dimensions = array<i32: 1>} : vector<128x256xi32>
    %12 = vector.shape_cast %10 : vector<128xi32> to vector<128x1xi32>
    %13 = vector.broadcast %12 : vector<128x1xi32> to vector<128x256xi32>
    %14 = arith.cmpi eq, %11, %13 : vector<128x256xi32>
    %15 = arith.extui %14 : vector<128x256xi1> to vector<128x256xi32>
    %16 = arith.sitofp %15 : vector<128x256xi32> to vector<128x256xf32>
    %cst_6 = arith.constant dense<0.000000e+00> : vector<128x128xf32>
    %17 = tpu.matmul %16, %1, %cst_6 {dimension_numbers = #tpu.dot_dimension_numbers<[1], [0], [0], [1], [0, 0, 1, 1], [], []>} : vector<128x256xf32>, vector<256x128xf32>, vector<128x128xf32> -> vector<128x128xf32>
    %18 = tpu.iota {dimensions = array<i32: 0>} : vector<128x1xi32>
    %c128_i32 = arith.constant 128 : i32
    %19 = arith.muli %arg0, %c128_i32 : i32
    %20 = vector.broadcast %19 : i32 to vector<128x1xi32>
    %21 = arith.addi %20, %18 : vector<128x1xi32>
    %c128_i32_7 = arith.constant 128 : i32
    %22 = vector.broadcast %c128_i32_7 : i32 to vector<128x1xi32>
    %23 = arith.cmpi slt, %21, %22 : vector<128x1xi32>
    %24 = arith.extui %23 : vector<128x1xi1> to vector<128x1xi32>
    %25 = arith.sitofp %24 : vector<128x1xi32> to vector<128x1xf32>
    %c0_8 = arith.constant 0 : index
    %c0_9 = arith.constant 0 : index
    %26 = vector.load %arg4[%c0_8, %c0_9] : memref<128x128xf32, #tpu.memory_space<vmem>>, vector<128x128xf32>
    tpu.vector_store %arg4[%c0_8, %c0_9], %17 {strides = array<i32>} : memref<128x128xf32, #tpu.memory_space<vmem>>, vector<128x128xf32>,
    %27 = vector.shape_cast %10 : vector<128xi32> to vector<1x128xi32>
    %c0_10 = arith.constant 0 : index
    %c0_11 = arith.constant 0 : index
    %28 = vector.load %arg5[%c0_10, %c0_11] : memref<1x128xi32, #tpu.memory_space<vmem>>, vector<1x128xi32>
    tpu.vector_store %arg5[%c0_10, %c0_11], %27 {strides = array<i32>} : memref<1x128xi32, #tpu.memory_space<vmem>>, vector<1x128xi32>,
    %29 = vector.broadcast %25 : vector<128x1xf32> to vector<128x256xf32>
    %30 = arith.mulf %16, %29 : vector<128x256xf32>
    %cst_12 = arith.constant dense<0.000000e+00> : vector<256xf32>
    %31 = vector.multi_reduction <add>, %30, %cst_12 [0] : vector<128x256xf32> to vector<256xf32>
    %32 = vector.shape_cast %31 : vector<256xf32> to vector<1x256xf32>
    %c0_13 = arith.constant 0 : index
    %c0_14 = arith.constant 0 : index
    %33 = vector.load %arg6[%c0_13, %c0_14] : memref<1x256xf32, #tpu.memory_space<vmem>>, vector<1x256xf32>
    tpu.vector_store %arg6[%c0_13, %c0_14], %32 {strides = array<i32>} : memref<1x256xf32, #tpu.memory_space<vmem>>, vector<1x256xf32>,
    %34 = arith.subf %17, %0 : vector<128x128xf32>
    %35 = arith.mulf %34, %34 : vector<128x128xf32>
    %36 = vector.broadcast %25 : vector<128x1xf32> to vector<128x128xf32>
    %37 = arith.mulf %35, %36 : vector<128x128xf32>
    %38 = vector.shape_cast %37 : vector<128x128xf32> to vector<1x128x128xf32>
    %cst_15 = arith.constant dense<0.000000e+00> : vector<1xf32>
    %39 = vector.multi_reduction <add>, %38, %cst_15 [1, 2] : vector<1x128x128xf32> to vector<1xf32>
    %40 = vector.shape_cast %39 : vector<1xf32> to vector<1x1x1xf32>
    %41 = vector.extract %40[0, 0, 0] : f32 from vector<1x1x1xf32>
    %42 = vector.broadcast %41 : f32 to vector<1x128xf32>
    %c0_16 = arith.constant 0 : index
    %c0_17 = arith.constant 0 : index
    %43 = vector.load %arg7[%c0_16, %c0_17] : memref<1x128xf32, #tpu.memory_space<vmem>>, vector<1x128xf32>
    tpu.vector_store %arg7[%c0_16, %c0_17], %42 {strides = array<i32>} : memref<1x128xf32, #tpu.memory_space<vmem>>, vector<1x128xf32>,
    return
  }
  func.func @transform_0(%arg0: i32) -> (i32, i32) {
    %c0_i32 = arith.constant 0 : i32
    %c0_i32_0 = arith.constant 0 : i32
    return %arg0, %c0_i32 : i32, i32
  }
  func.func @transform_1(%arg0: i32) -> (i32, i32) {
    %c0_i32 = arith.constant 0 : i32
    %c0_i32_0 = arith.constant 0 : i32
    %c0_i32_1 = arith.constant 0 : i32
    return %c0_i32, %c0_i32_0 : i32, i32
  }
  func.func @transform_2(%arg0: i32) -> (i32, i32) {
    %c0_i32 = arith.constant 0 : i32
    %c0_i32_0 = arith.constant 0 : i32
    %c0_i32_1 = arith.constant 0 : i32
    return %c0_i32, %c0_i32_0 : i32, i32
  }
  func.func @transform_3(%arg0: i32) -> (i32, i32) {
    %c0_i32 = arith.constant 0 : i32
    %c0_i32_0 = arith.constant 0 : i32
    return %arg0, %c0_i32 : i32, i32
  }
  func.func @transform_4(%arg0: i32) -> (i32, i32) {
    %c0_i32 = arith.constant 0 : i32
    %c0_i32_0 = arith.constant 0 : i32
    return %arg0, %c0_i32 : i32, i32
  }
  func.func @transform_5(%arg0: i32) -> (i32, i32) {
    %c0_i32 = arith.constant 0 : i32
    %c0_i32_0 = arith.constant 0 : i32
    return %arg0, %c0_i32 : i32, i32
  }
  func.func @transform_6(%arg0: i32) -> (i32, i32) {
    %c0_i32 = arith.constant 0 : i32
    %c0_i32_0 = arith.constant 0 : i32
    return %arg0, %c0_i32 : i32, i32
  }
}

</mosaic_0001>

<llo_original>
// kernel: a_call__.1
$region0: #{a_call__.1}
  #allocation0 [shape = 'u32[]', space=smem, size = 0x4, offset = 0x4, fixed_abs, tag = 'smem constant byte address 0x4 - core index']
  #allocation1 [shape = 'u32[144,128]{1,0:T(1,128)}', space=vmem, size = 0x12000, scoped, tag = 'internal scratch']
  %s0 = inlined_call_operand.hbm [shape: f32[128,128], index: 0, kind: input, shape index: {}]
  %s1 = inlined_call_operand.hbm [shape: f32[256,128], index: 1, kind: input, shape index: {}]
  %s2 = inlined_call_operand.vmem [shape: f32[1,256], index: 2, kind: input, shape index: {}]
  %s3 = inlined_call_operand.vmem [shape: f32[128,128], index: 3, kind: output, shape index: {0}]
  %s4 = inlined_call_operand.vmem [shape: s32[1,128], index: 4, kind: output, shape index: {1}]
  %s5 = inlined_call_operand.vmem [shape: f32[1,256], index: 5, kind: output, shape index: {2}]
  %s6 = inlined_call_operand.vmem [shape: f32[1,128], index: 6, kind: output, shape index: {3}]
  %7 = xla_tuple %s3, %s4, %s5, %s6
  %s8 = sld [smem:[#allocation0]]
  $region54: #{a_call__.1} parent=0
    _
  %s10 = ssub.s32 1, %s8
  %s11 = scalar_select 0, %s10, %s8
  $region1: #{a_call__.1} parent=0
    #allocation2 [shape = 'u8[65536]{0}', space=vmem, size = 0x10000, scoped, tag = 'input window, operand 0, single buffered']
    #allocation3 [shape = 's32[1]{0}', space=sflag, size = 0x4, scoped, tag = 'scoped memory for a_call__.1']
    #allocation4 [shape = 'u8[131072]{0}', space=vmem, size = 0x20000, scoped, tag = 'input window, operand 1, single buffered']
    #allocation5 [shape = 's32[1]{0}', space=sflag, size = 0x4, scoped, tag = 'scoped memory for a_call__.1']
    %12 = vsyncpa [#allocation3], 0
    %13 = vsyncpa [#allocation5], 0
    // Predicated region
    $region2: #{a_call__.1} parent=1 // pred_check
      _
    $region3: #{a_call__.1} parent=1 // pred_check_branch
      %15 = sbr.rel (0) target = $region5
    $region4: #{a_call__.1} parent=1 // pred_region
      %s17 = ssub.s32 2048, 2048
      %18 = vsyncadd [#allocation3], %s17
      %s19 = sshll.u32 [#allocation2], 4
      %s20 = int_to_ptr.vmem [resolvable:$true] %s19
      %25 = dma.hbm_to_vmem [thread:$0]  %s0, 2048, %s20, [#allocation3], 128, 128, 8
    $region5: #{a_call__.1} parent=1 // pred_fallthru
      _
    // Predicated region
    $region6: #{a_call__.1} parent=1 // pred_check
      _
    $region7: #{a_call__.1} parent=1 // pred_check_branch
      %27 = sbr.rel (0) target = $region9
    $region8: #{a_call__.1} parent=1 // pred_region
      %s29 = ssub.s32 4096, 4096
      %30 = vsyncadd [#allocation5], %s29
      %s31 = sshll.u32 [#allocation4], 4
      %s32 = int_to_ptr.vmem [resolvable:$true] %s31
      %37 = dma.hbm_to_vmem [thread:$0]  %s1, 4096, %s32, [#allocation5], 128, 128, 8
    $region9: #{a_call__.1} parent=1 // pred_fallthru
      _
    // Predicated region
    $region10: #{a_call__.1} parent=1 // pred_check
      _
    $region11: #{a_call__.1} parent=1 // pred_check_branch
      %39 = sbr.rel (0) target = $region13
    $region12: #{a_call__.1} parent=1 // pred_region
      _
    $region13: #{a_call__.1} parent=1 // pred_fallthru
      _
    // Predicated region
    $region14: #{a_call__.1} parent=1 // pred_check
      _
    $region15: #{a_call__.1} parent=1 // pred_check_branch
      %41 = sbr.rel (0) target = $region17
    $region16: #{a_call__.1} parent=1 // pred_region
      %42 = dma.done [#allocation3], 2048
    $region17: #{a_call__.1} parent=1 // pred_fallthru
      _
    // Predicated region
    $region18: #{a_call__.1} parent=1 // pred_check
      _
    $region19: #{a_call__.1} parent=1 // pred_check_branch
      %44 = sbr.rel (0) target = $region21
    $region20: #{a_call__.1} parent=1 // pred_region
      %45 = dma.done [#allocation5], 4096
    $region21: #{a_call__.1} parent=1 // pred_fallthru
      _
    %v47 = vld [vmem:[#allocation2] sm:$0xff]
    %v48 = vld [vmem:[#allocation2 + $0x8] sm:$0xff]
    %v49 = vld [vmem:[#allocation2 + $0x10] sm:$0xff]
    %v50 = vld [vmem:[#allocation2 + $0x18] sm:$0xff]
    %v51 = vld [vmem:[#allocation2 + $0x20] sm:$0xff]
    %v52 = vld [vmem:[#allocation2 + $0x28] sm:$0xff]
    %v53 = vld [vmem:[#allocation2 + $0x30] sm:$0xff]
    %v54 = vld [vmem:[#allocation2 + $0x38] sm:$0xff]
    %v55 = vld [vmem:[#allocation2 + $0x40] sm:$0xff]
    %v56 = vld [vmem:[#allocation2 + $0x48] sm:$0xff]
    %v57 = vld [vmem:[#allocation2 + $0x50] sm:$0xff]
    %v58 = vld [vmem:[#allocation2 + $0x58] sm:$0xff]
    %v59 = vld [vmem:[#allocation2 + $0x60] sm:$0xff]
    %v60 = vld [vmem:[#allocation2 + $0x68] sm:$0xff]
    %v61 = vld [vmem:[#allocation2 + $0x70] sm:$0xff]
    %v62 = vld [vmem:[#allocation2 + $0x78] sm:$0xff]
    %v63 = vld [vmem:[#allocation4] sm:$0xff]
    %v64 = vld [vmem:[#allocation4 + $0x8] sm:$0xff]
    %v65 = vld [vmem:[#allocation4 + $0x10] sm:$0xff]
    %v66 = vld [vmem:[#allocation4 + $0x18] sm:$0xff]
    %v67 = vld [vmem:[#allocation4 + $0x20] sm:$0xff]
    %v68 = vld [vmem:[#allocation4 + $0x28] sm:$0xff]
    %v69 = vld [vmem:[#allocation4 + $0x30] sm:$0xff]
    %v70 = vld [vmem:[#allocation4 + $0x38] sm:$0xff]
    %v71 = vld [vmem:[#allocation4 + $0x40] sm:$0xff]
    %v72 = vld [vmem:[#allocation4 + $0x48] sm:$0xff]
    %v73 = vld [vmem:[#allocation4 + $0x50] sm:$0xff]
    %v74 = vld [vmem:[#allocation4 + $0x58] sm:$0xff]
    %v75 = vld [vmem:[#allocation4 + $0x60] sm:$0xff]
    %v76 = vld [vmem:[#allocation4 + $0x68] sm:$0xff]
    %v77 = vld [vmem:[#allocation4 + $0x70] sm:$0xff]
    %v78 = vld [vmem:[#allocation4 + $0x78] sm:$0xff]
    %v79 = vld [vmem:[#allocation4 + $0x80] sm:$0xff]
    %v80 = vld [vmem:[#allocation4 + $0x88] sm:$0xff]
    %v81 = vld [vmem:[#allocation4 + $0x90] sm:$0xff]
    %v82 = vld [vmem:[#allocation4 + $0x98] sm:$0xff]
    %v83 = vld [vmem:[#allocation4 + $0xa0] sm:$0xff]
    %v84 = vld [vmem:[#allocation4 + $0xa8] sm:$0xff]
    %v85 = vld [vmem:[#allocation4 + $0xb0] sm:$0xff]
    %v86 = vld [vmem:[#allocation4 + $0xb8] sm:$0xff]
    %v87 = vld [vmem:[#allocation4 + $0xc0] sm:$0xff]
    %v88 = vld [vmem:[#allocation4 + $0xc8] sm:$0xff]
    %v89 = vld [vmem:[#allocation4 + $0xd0] sm:$0xff]
    %v90 = vld [vmem:[#allocation4 + $0xd8] sm:$0xff]
    %v91 = vld [vmem:[#allocation4 + $0xe0] sm:$0xff]
    %v92 = vld [vmem:[#allocation4 + $0xe8] sm:$0xff]
    %v93 = vld [vmem:[#allocation4 + $0xf0] sm:$0xff]
    %v94 = vld [vmem:[#allocation4 + $0xf8] sm:$0xff]
    %v95 = vld [vmem:[%s2] sm:$0x3]
    %v96 = vpack.c.bf16 %v48, %v47
    %v97 = vpack.c.bf16 %v50, %v49
    %v98 = vpack.c.bf16 %v52, %v51
    %v99 = vpack.c.bf16 %v54, %v53
    %v100 = vpack.c.bf16 %v56, %v55
    %v101 = vpack.c.bf16 %v58, %v57
    %v102 = vpack.c.bf16 %v60, %v59
    %v103 = vpack.c.bf16 %v62, %v61
    %v104 = vpack.c.bf16 %v64, %v63
    %v105 = vpack.c.bf16 %v66, %v65
    %v106 = vpack.c.bf16 %v68, %v67
    %v107 = vpack.c.bf16 %v70, %v69
    %v108 = vpack.c.bf16 %v72, %v71
    %v109 = vpack.c.bf16 %v74, %v73
    %v110 = vpack.c.bf16 %v76, %v75
    %v111 = vpack.c.bf16 %v78, %v77
    %v112 = vpack.c.bf16 %v80, %v79
    %v113 = vpack.c.bf16 %v82, %v81
    %v114 = vpack.c.bf16 %v84, %v83
    %v115 = vpack.c.bf16 %v86, %v85
    %v116 = vpack.c.bf16 %v88, %v87
    %v117 = vpack.c.bf16 %v90, %v89
    %v118 = vpack.c.bf16 %v92, %v91
    %v119 = vpack.c.bf16 %v94, %v93
    %120 = vmatprep.subr.bf16.mxu0 0
    %121 = vmatpush1.bf16.xpose.msra.mxu0 %v104
    %122 = vmatprep.subr.bf16.mxu0 0
    %123 = vmatpush1.bf16.xpose.msra.mxu0 %v105
    %124 = vmatprep.subr.bf16.mxu0 0
    %125 = vmatpush1.bf16.xpose.msra.mxu0 %v106
    %126 = vmatprep.subr.bf16.mxu0 0
    %127 = vmatpush1.bf16.xpose.msra.mxu0 %v107
    %128 = vmatprep.subr.bf16.mxu0 0
    %129 = vmatpush1.bf16.xpose.msra.mxu0 %v108
    %130 = vmatprep.subr.bf16.mxu0 0
    %131 = vmatpush1.bf16.xpose.msra.mxu0 %v109
    %132 = vmatprep.subr.bf16.mxu0 0
    %133 = vmatpush1.bf16.xpose.msra.mxu0 %v110
    %134 = vmatprep.subr.bf16.mxu0 0
    %135 = vmatpush1.bf16.xpose.msra.mxu0 %v111
    %136 = vmatprep.subr.bf16.mxu0 0
    %137 = vmatpush1.bf16.xpose.msra.mxu0 %v112
    %138 = vmatprep.subr.bf16.mxu0 0
    %139 = vmatpush1.bf16.xpose.msra.mxu0 %v113
    %140 = vmatprep.subr.bf16.mxu0 0
    %141 = vmatpush1.bf16.xpose.msra.mxu0 %v114
    %142 = vmatprep.subr.bf16.mxu0 0
    %143 = vmatpush1.bf16.xpose.msra.mxu0 %v115
    %144 = vmatprep.subr.bf16.mxu0 0
    %145 = vmatpush1.bf16.xpose.msra.mxu0 %v116
    %146 = vmatprep.subr.bf16.mxu0 0
    %147 = vmatpush1.bf16.xpose.msra.mxu0 %v117
    %148 = vmatprep.subr.bf16.mxu0 0
    %149 = vmatpush1.bf16.xpose.msra.mxu0 %v118
    %150 = vmatprep.subr.bf16.mxu0 0
    %151 = vmatpush1.bf16.xpose.msra.mxu0 %v119
    %152 = vmatprep.mubr.bf16.mxu0 0
    %153 = vmatmul.mubr.bf16.gmra.mrb[0].mxu0 %v96
    %v154 = vpop.f32.mrb[0].mxu0
    %v155 = vadd.f32 0.0, %v154
    %v156 = vpop.f32.mrb[0].mxu0
    %v157 = vadd.f32 0.0, %v156
    %v158 = vpop.f32.mrb[0].mxu0
    %v159 = vadd.f32 0.0, %v158
    %v160 = vpop.f32.mrb[0].mxu0
    %v161 = vadd.f32 0.0, %v160
    %162 = vmatprep.mubr.bf16.mxu0 0
    %163 = vmatmul.mubr.bf16.gmra.mrb[0].mxu0 %v97
    %v164 = vpop.f32.mrb[0].mxu0
    %v165 = vadd.f32 0.0, %v164
    %v166 = vpop.f32.mrb[0].mxu0
    %v167 = vadd.f32 0.0, %v166
    %v168 = vpop.f32.mrb[0].mxu0
    %v169 = vadd.f32 0.0, %v168
    %v170 = vpop.f32.mrb[0].mxu0
    %v171 = vadd.f32 0.0, %v170
    %172 = vmatprep.mubr.bf16.mxu0 0
    %173 = vmatmul.mubr.bf16.gmra.mrb[0].mxu0 %v98
    %v174 = vpop.f32.mrb[0].mxu0
    %v175 = vadd.f32 0.0, %v174
    %v176 = vpop.f32.mrb[0].mxu0
    %v177 = vadd.f32 0.0, %v176
    %v178 = vpop.f32.mrb[0].mxu0
    %v179 = vadd.f32 0.0, %v178
    %v180 = vpop.f32.mrb[0].mxu0
    %v181 = vadd.f32 0.0, %v180
    %182 = vmatprep.mubr.bf16.mxu0 0
    %183 = vmatmul.mubr.bf16.gmra.mrb[0].mxu0 %v99
    %v184 = vpop.f32.mrb[0].mxu0
    %v185 = vadd.f32 0.0, %v184
    %v186 = vpop.f32.mrb[0].mxu0
    %v187 = vadd.f32 0.0, %v186
    %v188 = vpop.f32.mrb[0].mxu0
    %v189 = vadd.f32 0.0, %v188
    %v190 = vpop.f32.mrb[0].mxu0
    %v191 = vadd.f32 0.0, %v190
    %192 = vmatprep.mubr.bf16.mxu0 0
    %193 = vmatmul.mubr.bf16.gmra.mrb[0].mxu0 %v100
    %v194 = vpop.f32.mrb[0].mxu0
    %v195 = vadd.f32 0.0, %v194
    %v196 = vpop.f32.mrb[0].mxu0
    %v197 = vadd.f32 0.0, %v196
    %v198 = vpop.f32.mrb[0].mxu0
    %v199 = vadd.f32 0.0, %v198
    %v200 = vpop.f32.mrb[0].mxu0
    %v201 = vadd.f32 0.0, %v200
    %202 = vmatprep.mubr.bf16.mxu0 0
    %203 = vmatmul.mubr.bf16.gmra.mrb[0].mxu0 %v101
    %v204 = vpop.f32.mrb[0].mxu0
    %v205 = vadd.f32 0.0, %v204
    %v206 = vpop.f32.mrb[0].mxu0
    %v207 = vadd.f32 0.0, %v206
    %v208 = vpop.f32.mrb[0].mxu0
    %v209 = vadd.f32 0.0, %v208
    %v210 = vpop.f32.mrb[0].mxu0
    %v211 = vadd.f32 0.0, %v210
    %212 = vmatprep.mubr.bf16.mxu0 0
    %213 = vmatmul.mubr.bf16.gmra.mrb[0].mxu0 %v102
    %v214 = vpop.f32.mrb[0].mxu0
    %v215 = vadd.f32 0.0, %v214
    %v216 = vpop.f32.mrb[0].mxu0
    %v217 = vadd.f32 0.0, %v216
    %v218 = vpop.f32.mrb[0].mxu0
    %v219 = vadd.f32 0.0, %v218
    %v220 = vpop.f32.mrb[0].mxu0
    %v221 = vadd.f32 0.0, %v220
    %222 = vmatprep.mubr.bf16.mxu0 0
    %223 = vmatmul.mubr.bf16.gmra.mrb[0].mxu0 %v103
    %v224 = vpop.f32.mrb[0].mxu0
    %v225 = vadd.f32 0.0, %v224
    %v226 = vpop.f32.mrb[0].mxu0
    %v227 = vadd.f32 0.0, %v226
    %v228 = vpop.f32.mrb[0].mxu0
    %v229 = vadd.f32 0.0, %v228
    %v230 = vpop.f32.mrb[0].mxu0
    %v231 = vadd.f32 0.0, %v230
    %232 = vdwg.mxu0
    %v233 = vmul.f32 %v155, 2.0
    %v234 = vmul.f32 %v157, 2.0
    %v235 = vmul.f32 %v159, 2.0
    %v236 = vmul.f32 %v161, 2.0
    %v237 = vmul.f32 %v165, 2.0
    %v238 = vmul.f32 %v167, 2.0
    %v239 = vmul.f32 %v169, 2.0
    %v240 = vmul.f32 %v171, 2.0
    %v241 = vmul.f32 %v175, 2.0
    %v242 = vmul.f32 %v177, 2.0
    %v243 = vmul.f32 %v179, 2.0
    %v244 = vmul.f32 %v181, 2.0
    %v245 = vmul.f32 %v185, 2.0
    %v246 = vmul.f32 %v187, 2.0
    %v247 = vmul.f32 %v189, 2.0
    %v248 = vmul.f32 %v191, 2.0
    %v249 = vmul.f32 %v195, 2.0
    %v250 = vmul.f32 %v197, 2.0
    %v251 = vmul.f32 %v199, 2.0
    %v252 = vmul.f32 %v201, 2.0
    %v253 = vmul.f32 %v205, 2.0
    %v254 = vmul.f32 %v207, 2.0
    %v255 = vmul.f32 %v209, 2.0
    %v256 = vmul.f32 %v211, 2.0
    %v257 = vmul.f32 %v215, 2.0
    %v258 = vmul.f32 %v217, 2.0
    %v259 = vmul.f32 %v219, 2.0
    %v260 = vmul.f32 %v221, 2.0
    %v261 = vmul.f32 %v225, 2.0
    %v262 = vmul.f32 %v227, 2.0
    %v263 = vmul.f32 %v229, 2.0
    %v264 = vmul.f32 %v231, 2.0
    %v266 = vlaneseq
    %v267 = vshrl.u32 %v266, 7
    %v268 = vsub.s32 0, %v267
    %v269 = vrot.slane %v95, %v268
    %v270 = vlaneseq
    %v271 = vshrl.u32 %v270, 7
    %v272 = vsub.s32 1, %v271
    %v273 = vrot.slane %v95, %v272
    %v276 = vsub.f32 %v269, %v233
    %v277 = vsub.f32 %v273, %v234
    %v278 = vsub.f32 %v269, %v235
    %v279 = vsub.f32 %v273, %v236
    %v280 = vsub.f32 %v269, %v237
    %v281 = vsub.f32 %v273, %v238
    %v282 = vsub.f32 %v269, %v239
    %v283 = vsub.f32 %v273, %v240
    %v284 = vsub.f32 %v269, %v241
    %v285 = vsub.f32 %v273, %v242
    %v286 = vsub.f32 %v269, %v243
    %v287 = vsub.f32 %v273, %v244
    %v288 = vsub.f32 %v269, %v245
    %v289 = vsub.f32 %v273, %v246
    %v290 = vsub.f32 %v269, %v247
    %v291 = vsub.f32 %v273, %v248
    %v292 = vsub.f32 %v269, %v249
    %v293 = vsub.f32 %v273, %v250
    %v294 = vsub.f32 %v269, %v251
    %v295 = vsub.f32 %v273, %v252
    %v296 = vsub.f32 %v269, %v253
    %v297 = vsub.f32 %v273, %v254
    %v298 = vsub.f32 %v269, %v255
    %v299 = vsub.f32 %v273, %v256
    %v300 = vsub.f32 %v269, %v257
    %v301 = vsub.f32 %v273, %v258
    %v302 = vsub.f32 %v269, %v259
    %v303 = vsub.f32 %v273, %v260
    %v304 = vsub.f32 %v269, %v261
    %v305 = vsub.f32 %v273, %v262
    %v306 = vsub.f32 %v269, %v263
    %v307 = vsub.f32 %v273, %v264
    %v308 = vlaneseq
    %v309 = vand.u32 %v308, 127
    %v310 = vadd.s32 %v309, 128
    %vm311 = vcmp.le.f32.partialorder %v276, %v277
    %v312 = vsel %vm311, %v276, %v277
    %v313 = vsel %vm311, %v309, %v310
    %314 = vmin.index.xlane.f32.xlu0 %v312
    %v315 = vpop.xlane.xlu0 %314
    %316 = vset.pattern.permute.xlu0 %v315
    %317 = vperm.xlu0 %316, %v313
    %v318 = vpop.permute.xlu0 %317
    %vm319 = vcmp.le.f32.partialorder %v278, %v279
    %v320 = vsel %vm319, %v278, %v279
    %v321 = vsel %vm319, %v309, %v310
    %322 = vmin.index.xlane.f32.xlu0 %v320
    %v323 = vpop.xlane.xlu0 %322
    %324 = vset.pattern.permute.xlu0 %v323
    %325 = vperm.xlu0 %324, %v321
    %v326 = vpop.permute.xlu0 %325
    %vm327 = vcmp.le.f32.partialorder %v280, %v281
    %v328 = vsel %vm327, %v280, %v281
    %v329 = vsel %vm327, %v309, %v310
    %330 = vmin.index.xlane.f32.xlu0 %v328
    %v331 = vpop.xlane.xlu0 %330
    %332 = vset.pattern.permute.xlu0 %v331
    %333 = vperm.xlu0 %332, %v329
    %v334 = vpop.permute.xlu0 %333
    %vm335 = vcmp.le.f32.partialorder %v282, %v283
    %v336 = vsel %vm335, %v282, %v283
    %v337 = vsel %vm335, %v309, %v310
    %338 = vmin.index.xlane.f32.xlu0 %v336
    %v339 = vpop.xlane.xlu0 %338
    %340 = vset.pattern.permute.xlu0 %v339
    %341 = vperm.xlu0 %340, %v337
    %v342 = vpop.permute.xlu0 %341
    %vm343 = vcmp.le.f32.partialorder %v284, %v285
    %v344 = vsel %vm343, %v284, %v285
    %v345 = vsel %vm343, %v309, %v310
    %346 = vmin.index.xlane.f32.xlu0 %v344
    %v347 = vpop.xlane.xlu0 %346
    %348 = vset.pattern.permute.xlu0 %v347
    %349 = vperm.xlu0 %348, %v345
    %v350 = vpop.permute.xlu0 %349
    %vm351 = vcmp.le.f32.partialorder %v286, %v287
    %v352 = vsel %vm351, %v286, %v287
    %v353 = vsel %vm351, %v309, %v310
    %354 = vmin.index.xlane.f32.xlu0 %v352
    %v355 = vpop.xlane.xlu0 %354
    %356 = vset.pattern.permute.xlu0 %v355
    %357 = vperm.xlu0 %356, %v353
    %v358 = vpop.permute.xlu0 %357
    %vm359 = vcmp.le.f32.partialorder %v288, %v289
    %v360 = vsel %vm359, %v288, %v289
    %v361 = vsel %vm359, %v309, %v310
    %362 = vmin.index.xlane.f32.xlu0 %v360
    %v363 = vpop.xlane.xlu0 %362
    %364 = vset.pattern.permute.xlu0 %v363
    %365 = vperm.xlu0 %364, %v361
    %v366 = vpop.permute.xlu0 %365
    %vm367 = vcmp.le.f32.partialorder %v290, %v291
    %v368 = vsel %vm367, %v290, %v291
    %v369 = vsel %vm367, %v309, %v310
    %370 = vmin.index.xlane.f32.xlu0 %v368
    %v371 = vpop.xlane.xlu0 %370
    %372 = vset.pattern.permute.xlu0 %v371
    %373 = vperm.xlu0 %372, %v369
    %v374 = vpop.permute.xlu0 %373
    %vm375 = vcmp.le.f32.partialorder %v292, %v293
    %v376 = vsel %vm375, %v292, %v293
    %v377 = vsel %vm375, %v309, %v310
    %378 = vmin.index.xlane.f32.xlu0 %v376
    %v379 = vpop.xlane.xlu0 %378
    %380 = vset.pattern.permute.xlu0 %v379
    %381 = vperm.xlu0 %380, %v377
    %v382 = vpop.permute.xlu0 %381
    %vm383 = vcmp.le.f32.partialorder %v294, %v295
    %v384 = vsel %vm383, %v294, %v295
    %v385 = vsel %vm383, %v309, %v310
    %386 = vmin.index.xlane.f32.xlu0 %v384
    %v387 = vpop.xlane.xlu0 %386
    %388 = vset.pattern.permute.xlu0 %v387
    %389 = vperm.xlu0 %388, %v385
    %v390 = vpop.permute.xlu0 %389
    %vm391 = vcmp.le.f32.partialorder %v296, %v297
    %v392 = vsel %vm391, %v296, %v297
    %v393 = vsel %vm391, %v309, %v310
    %394 = vmin.index.xlane.f32.xlu0 %v392
    %v395 = vpop.xlane.xlu0 %394
    %396 = vset.pattern.permute.xlu0 %v395
    %397 = vperm.xlu0 %396, %v393
    %v398 = vpop.permute.xlu0 %397
    %vm399 = vcmp.le.f32.partialorder %v298, %v299
    %v400 = vsel %vm399, %v298, %v299
    %v401 = vsel %vm399, %v309, %v310
    %402 = vmin.index.xlane.f32.xlu0 %v400
    %v403 = vpop.xlane.xlu0 %402
    %404 = vset.pattern.permute.xlu0 %v403
    %405 = vperm.xlu0 %404, %v401
    %v406 = vpop.permute.xlu0 %405
    %vm407 = vcmp.le.f32.partialorder %v300, %v301
    %v408 = vsel %vm407, %v300, %v301
    %v409 = vsel %vm407, %v309, %v310
    %410 = vmin.index.xlane.f32.xlu0 %v408
    %v411 = vpop.xlane.xlu0 %410
    %412 = vset.pattern.permute.xlu0 %v411
    %413 = vperm.xlu0 %412, %v409
    %v414 = vpop.permute.xlu0 %413
    %vm415 = vcmp.le.f32.partialorder %v302, %v303
    %v416 = vsel %vm415, %v302, %v303
    %v417 = vsel %vm415, %v309, %v310
    %418 = vmin.index.xlane.f32.xlu0 %v416
    %v419 = vpop.xlane.xlu0 %418
    %420 = vset.pattern.permute.xlu0 %v419
    %421 = vperm.xlu0 %420, %v417
    %v422 = vpop.permute.xlu0 %421
    %vm423 = vcmp.le.f32.partialorder %v304, %v305
    %v424 = vsel %vm423, %v304, %v305
    %v425 = vsel %vm423, %v309, %v310
    %426 = vmin.index.xlane.f32.xlu0 %v424
    %v427 = vpop.xlane.xlu0 %426
    %428 = vset.pattern.permute.xlu0 %v427
    %429 = vperm.xlu0 %428, %v425
    %v430 = vpop.permute.xlu0 %429
    %vm431 = vcmp.le.f32.partialorder %v306, %v307
    %v432 = vsel %vm431, %v306, %v307
    %v433 = vsel %vm431, %v309, %v310
    %434 = vmin.index.xlane.f32.xlu0 %v432
    %v435 = vpop.xlane.xlu0 %434
    %436 = vset.pattern.permute.xlu0 %v435
    %437 = vperm.xlu0 %436, %v433
    %v438 = vpop.permute.xlu0 %437
    %vm439 = vcmp.eq.s32.totalorder %v309, %v318
    %vm440 = vcmp.eq.s32.totalorder %v310, %v318
    %vm441 = vcmp.eq.s32.totalorder %v309, %v326
    %vm442 = vcmp.eq.s32.totalorder %v310, %v326
    %vm443 = vcmp.eq.s32.totalorder %v309, %v334
    %vm444 = vcmp.eq.s32.totalorder %v310, %v334
    %vm445 = vcmp.eq.s32.totalorder %v309, %v342
    %vm446 = vcmp.eq.s32.totalorder %v310, %v342
    %vm447 = vcmp.eq.s32.totalorder %v309, %v350
    %vm448 = vcmp.eq.s32.totalorder %v310, %v350
    %vm449 = vcmp.eq.s32.totalorder %v309, %v358
    %vm450 = vcmp.eq.s32.totalorder %v310, %v358
    %vm451 = vcmp.eq.s32.totalorder %v309, %v366
    %vm452 = vcmp.eq.s32.totalorder %v310, %v366
    %vm453 = vcmp.eq.s32.totalorder %v309, %v374
    %vm454 = vcmp.eq.s32.totalorder %v310, %v374
    %vm455 = vcmp.eq.s32.totalorder %v309, %v382
    %vm456 = vcmp.eq.s32.totalorder %v310, %v382
    %vm457 = vcmp.eq.s32.totalorder %v309, %v390
    %vm458 = vcmp.eq.s32.totalorder %v310, %v390
    %vm459 = vcmp.eq.s32.totalorder %v309, %v398
    %vm460 = vcmp.eq.s32.totalorder %v310, %v398
    %vm461 = vcmp.eq.s32.totalorder %v309, %v406
    %vm462 = vcmp.eq.s32.totalorder %v310, %v406
    %vm463 = vcmp.eq.s32.totalorder %v309, %v414
    %vm464 = vcmp.eq.s32.totalorder %v310, %v414
    %vm465 = vcmp.eq.s32.totalorder %v309, %v422
    %vm466 = vcmp.eq.s32.totalorder %v310, %v422
    %vm467 = vcmp.eq.s32.totalorder %v309, %v430
    %vm468 = vcmp.eq.s32.totalorder %v310, %v430
    %vm469 = vcmp.eq.s32.totalorder %v309, %v438
    %vm470 = vcmp.eq.s32.totalorder %v310, %v438
    %v471 = vsel %vm439, 1, 0
    %v472 = vsel %vm440, 1, 0
    %v473 = vsel %vm441, 1, 0
    %v474 = vsel %vm442, 1, 0
    %v475 = vsel %vm443, 1, 0
    %v476 = vsel %vm444, 1, 0
    %v477 = vsel %vm445, 1, 0
    %v478 = vsel %vm446, 1, 0
    %v479 = vsel %vm447, 1, 0
    %v480 = vsel %vm448, 1, 0
    %v481 = vsel %vm449, 1, 0
    %v482 = vsel %vm450, 1, 0
    %v483 = vsel %vm451, 1, 0
    %v484 = vsel %vm452, 1, 0
    %v485 = vsel %vm453, 1, 0
    %v486 = vsel %vm454, 1, 0
    %v487 = vsel %vm455, 1, 0
    %v488 = vsel %vm456, 1, 0
    %v489 = vsel %vm457, 1, 0
    %v490 = vsel %vm458, 1, 0
    %v491 = vsel %vm459, 1, 0
    %v492 = vsel %vm460, 1, 0
    %v493 = vsel %vm461, 1, 0
    %v494 = vsel %vm462, 1, 0
    %v495 = vsel %vm463, 1, 0
    %v496 = vsel %vm464, 1, 0
    %v497 = vsel %vm465, 1, 0
    %v498 = vsel %vm466, 1, 0
    %v499 = vsel %vm467, 1, 0
    %v500 = vsel %vm468, 1, 0
    %v501 = vsel %vm469, 1, 0
    %v502 = vsel %vm470, 1, 0
    %v503 = vcvt.s32.f32 %v471
    %v504 = vcvt.s32.f32 %v472
    %v505 = vcvt.s32.f32 %v473
    %v506 = vcvt.s32.f32 %v474
    %v507 = vcvt.s32.f32 %v475
    %v508 = vcvt.s32.f32 %v476
    %v509 = vcvt.s32.f32 %v477
    %v510 = vcvt.s32.f32 %v478
    %v511 = vcvt.s32.f32 %v479
    %v512 = vcvt.s32.f32 %v480
    %v513 = vcvt.s32.f32 %v481
    %v514 = vcvt.s32.f32 %v482
    %v515 = vcvt.s32.f32 %v483
    %v516 = vcvt.s32.f32 %v484
    %v517 = vcvt.s32.f32 %v485
    %v518 = vcvt.s32.f32 %v486
    %v519 = vcvt.s32.f32 %v487
    %v520 = vcvt.s32.f32 %v488
    %v521 = vcvt.s32.f32 %v489
    %v522 = vcvt.s32.f32 %v490
    %v523 = vcvt.s32.f32 %v491
    %v524 = vcvt.s32.f32 %v492
    %v525 = vcvt.s32.f32 %v493
    %v526 = vcvt.s32.f32 %v494
    %v527 = vcvt.s32.f32 %v495
    %v528 = vcvt.s32.f32 %v496
    %v529 = vcvt.s32.f32 %v497
    %v530 = vcvt.s32.f32 %v498
    %v531 = vcvt.s32.f32 %v499
    %v532 = vcvt.s32.f32 %v500
    %v533 = vcvt.s32.f32 %v501
    %v534 = vcvt.s32.f32 %v502
    %535 = vmatprep.subr.mxu0 0.0
    %536 = vmatpush1.msra.mxu0 %v63
    %537 = vmatprep.subr.mxu0 0.0
    %538 = vmatpush1.msra.mxu0 %v64
    %539 = vmatprep.subr.mxu0 0.0
    %540 = vmatpush1.msra.mxu0 %v65
    %541 = vmatprep.subr.mxu0 0.0
    %542 = vmatpush1.msra.mxu0 %v66
    %543 = vmatprep.subr.mxu0 0.0
    %544 = vmatpush1.msra.mxu0 %v67
    %545 = vmatprep.subr.mxu0 0.0
    %546 = vmatpush1.msra.mxu0 %v68
    %547 = vmatprep.subr.mxu0 0.0
    %548 = vmatpush1.msra.mxu0 %v69
    %549 = vmatprep.subr.mxu0 0.0
    %550 = vmatpush1.msra.mxu0 %v70
    %551 = vmatprep.subr.mxu0 0.0
    %552 = vmatpush1.msra.mxu0 %v71
    %553 = vmatprep.subr.mxu0 0.0
    %554 = vmatpush1.msra.mxu0 %v72
    %555 = vmatprep.subr.mxu0 0.0
    %556 = vmatpush1.msra.mxu0 %v73
    %557 = vmatprep.subr.mxu0 0.0
    %558 = vmatpush1.msra.mxu0 %v74
    %559 = vmatprep.subr.mxu0 0.0
    %560 = vmatpush1.msra.mxu0 %v75
    %561 = vmatprep.subr.mxu0 0.0
    %562 = vmatpush1.msra.mxu0 %v76
    %563 = vmatprep.subr.mxu0 0.0
    %564 = vmatpush1.msra.mxu0 %v77
    %565 = vmatprep.subr.mxu0 0.0
    %566 = vmatpush1.msra.mxu0 %v78
    %567 = vmatprep.subr.mxu0 0.0
    %568 = vmatpush1.msra.mxu0 %v79
    %569 = vmatprep.subr.mxu0 0.0
    %570 = vmatpush1.msra.mxu0 %v80
    %571 = vmatprep.subr.mxu0 0.0
    %572 = vmatpush1.msra.mxu0 %v81
    %573 = vmatprep.subr.mxu0 0.0
    %574 = vmatpush1.msra.mxu0 %v82
    %575 = vmatprep.subr.mxu0 0.0
    %576 = vmatpush1.msra.mxu0 %v83
    %577 = vmatprep.subr.mxu0 0.0
    %578 = vmatpush1.msra.mxu0 %v84
    %579 = vmatprep.subr.mxu0 0.0
    %580 = vmatpush1.msra.mxu0 %v85
    %581 = vmatprep.subr.mxu0 0.0
    %582 = vmatpush1.msra.mxu0 %v86
    %583 = vmatprep.subr.mxu0 0.0
    %584 = vmatpush1.msra.mxu0 %v87
    %585 = vmatprep.subr.mxu0 0.0
    %586 = vmatpush1.msra.mxu0 %v88
    %587 = vmatprep.subr.mxu0 0.0
    %588 = vmatpush1.msra.mxu0 %v89
    %589 = vmatprep.subr.mxu0 0.0
    %590 = vmatpush1.msra.mxu0 %v90
    %591 = vmatprep.subr.mxu0 0.0
    %592 = vmatpush1.msra.mxu0 %v91
    %593 = vmatprep.subr.mxu0 0.0
    %594 = vmatpush1.msra.mxu0 %v92
    %595 = vmatprep.subr.mxu0 0.0
    %596 = vmatpush1.msra.mxu0 %v93
    %597 = vmatprep.subr.mxu0 0.0
    %598 = vmatpush1.msra.mxu0 %v94
    %599 = vmatprep.mubr.f32.mxu0 %v504
    %600 = vmatmul.mubr.f32.gmra.mrb[0].mxu0 %v503
    %v601 = vpop.f32.mrb[0].mxu0
    %v602 = vadd.f32 0.0, %v601
    %v603 = vpop.f32.mrb[0].mxu0
    %604 = vmatprep.mubr.f32.mxu0 %v506
    %605 = vmatmul.mubr.f32.gmra.mrb[0].mxu0 %v505
    %v606 = vpop.f32.mrb[0].mxu0
    %v607 = vadd.f32 0.0, %v606
    %v608 = vpop.f32.mrb[0].mxu0
    %609 = vmatprep.mubr.f32.mxu0 %v508
    %610 = vmatmul.mubr.f32.gmra.mrb[0].mxu0 %v507
    %v611 = vpop.f32.mrb[0].mxu0
    %v612 = vadd.f32 0.0, %v611
    %v613 = vpop.f32.mrb[0].mxu0
    %614 = vmatprep.mubr.f32.mxu0 %v510
    %615 = vmatmul.mubr.f32.gmra.mrb[0].mxu0 %v509
    %v616 = vpop.f32.mrb[0].mxu0
    %v617 = vadd.f32 0.0, %v616
    %v618 = vpop.f32.mrb[0].mxu0
    %619 = vmatprep.mubr.f32.mxu0 %v512
    %620 = vmatmul.mubr.f32.gmra.mrb[0].mxu0 %v511
    %v621 = vpop.f32.mrb[0].mxu0
    %v622 = vadd.f32 0.0, %v621
    %v623 = vpop.f32.mrb[0].mxu0
    %624 = vmatprep.mubr.f32.mxu0 %v514
    %625 = vmatmul.mubr.f32.gmra.mrb[0].mxu0 %v513
    %v626 = vpop.f32.mrb[0].mxu0
    %v627 = vadd.f32 0.0, %v626
    %v628 = vpop.f32.mrb[0].mxu0
    %629 = vmatprep.mubr.f32.mxu0 %v516
    %630 = vmatmul.mubr.f32.gmra.mrb[0].mxu0 %v515
    %v631 = vpop.f32.mrb[0].mxu0
    %v632 = vadd.f32 0.0, %v631
    %v633 = vpop.f32.mrb[0].mxu0
    %634 = vmatprep.mubr.f32.mxu0 %v518
    %635 = vmatmul.mubr.f32.gmra.mrb[0].mxu0 %v517
    %v636 = vpop.f32.mrb[0].mxu0
    %v637 = vadd.f32 0.0, %v636
    %v638 = vpop.f32.mrb[0].mxu0
    %639 = vmatprep.mubr.f32.mxu0 %v520
    %640 = vmatmul.mubr.f32.gmra.mrb[0].mxu0 %v519
    %v641 = vpop.f32.mrb[0].mxu0
    %v642 = vadd.f32 0.0, %v641
    %v643 = vpop.f32.mrb[0].mxu0
    %644 = vmatprep.mubr.f32.mxu0 %v522
    %645 = vmatmul.mubr.f32.gmra.mrb[0].mxu0 %v521
    %v646 = vpop.f32.mrb[0].mxu0
    %v647 = vadd.f32 0.0, %v646
    %v648 = vpop.f32.mrb[0].mxu0
    %649 = vmatprep.mubr.f32.mxu0 %v524
    %650 = vmatmul.mubr.f32.gmra.mrb[0].mxu0 %v523
    %v651 = vpop.f32.mrb[0].mxu0
    %v652 = vadd.f32 0.0, %v651
    %v653 = vpop.f32.mrb[0].mxu0
    %654 = vmatprep.mubr.f32.mxu0 %v526
    %655 = vmatmul.mubr.f32.gmra.mrb[0].mxu0 %v525
    %v656 = vpop.f32.mrb[0].mxu0
    %v657 = vadd.f32 0.0, %v656
    %v658 = vpop.f32.mrb[0].mxu0
    %659 = vmatprep.mubr.f32.mxu0 %v528
    %660 = vmatmul.mubr.f32.gmra.mrb[0].mxu0 %v527
    %v661 = vpop.f32.mrb[0].mxu0
    %v662 = vadd.f32 0.0, %v661
    %v663 = vpop.f32.mrb[0].mxu0
    %664 = vmatprep.mubr.f32.mxu0 %v530
    %665 = vmatmul.mubr.f32.gmra.mrb[0].mxu0 %v529
    %v666 = vpop.f32.mrb[0].mxu0
    %v667 = vadd.f32 0.0, %v666
    %v668 = vpop.f32.mrb[0].mxu0
    %669 = vmatprep.mubr.f32.mxu0 %v532
    %670 = vmatmul.mubr.f32.gmra.mrb[0].mxu0 %v531
    %v671 = vpop.f32.mrb[0].mxu0
    %v672 = vadd.f32 0.0, %v671
    %v673 = vpop.f32.mrb[0].mxu0
    %674 = vmatprep.mubr.f32.mxu0 %v534
    %675 = vmatmul.mubr.f32.gmra.mrb[0].mxu0 %v533
    %v676 = vpop.f32.mrb[0].mxu0
    %v677 = vadd.f32 0.0, %v676
    %v678 = vpop.f32.mrb[0].mxu0
    %679 = vdwg.mxu0
    %v680 = vlaneseq
    %v681 = vshrl.u32 %v680, 7
    %v682 = vadd.s32 %v681, 8
    %v683 = vadd.s32 %v681, 16
    %v684 = vadd.s32 %v681, 24
    %v685 = vadd.s32 %v681, 32
    %v686 = vadd.s32 %v681, 40
    %v687 = vadd.s32 %v681, 48
    %v688 = vadd.s32 %v681, 56
    %v689 = vadd.s32 %v681, 64
    %v690 = vadd.s32 %v681, 72
    %v691 = vadd.s32 %v681, 80
    %v692 = vadd.s32 %v681, 88
    %v693 = vadd.s32 %v681, 96
    %v694 = vadd.s32 %v681, 104
    %v695 = vadd.s32 %v681, 112
    %v696 = vadd.s32 %v681, 120
    %s697 = smul.u32 0, 128
    %v698 = vstv %s697
    %v699 = vadd.s32 %v698, %v681
    %v700 = vadd.s32 %v698, %v682
    %v701 = vadd.s32 %v698, %v683
    %v702 = vadd.s32 %v698, %v684
    %v703 = vadd.s32 %v698, %v685
    %v704 = vadd.s32 %v698, %v686
    %v705 = vadd.s32 %v698, %v687
    %v706 = vadd.s32 %v698, %v688
    %v707 = vadd.s32 %v698, %v689
    %v708 = vadd.s32 %v698, %v690
    %v709 = vadd.s32 %v698, %v691
    %v710 = vadd.s32 %v698, %v692
    %v711 = vadd.s32 %v698, %v693
    %v712 = vadd.s32 %v698, %v694
    %v713 = vadd.s32 %v698, %v695
    %v714 = vadd.s32 %v698, %v696
    %vm715 = vcmp.lt.s32.totalorder %v699, 128
    %vm716 = vcmp.lt.s32.totalorder %v700, 128
    %vm717 = vcmp.lt.s32.totalorder %v701, 128
    %vm718 = vcmp.lt.s32.totalorder %v702, 128
    %vm719 = vcmp.lt.s32.totalorder %v703, 128
    %vm720 = vcmp.lt.s32.totalorder %v704, 128
    %vm721 = vcmp.lt.s32.totalorder %v705, 128
    %vm722 = vcmp.lt.s32.totalorder %v706, 128
    %vm723 = vcmp.lt.s32.totalorder %v707, 128
    %vm724 = vcmp.lt.s32.totalorder %v708, 128
    %vm725 = vcmp.lt.s32.totalorder %v709, 128
    %vm726 = vcmp.lt.s32.totalorder %v710, 128
    %vm727 = vcmp.lt.s32.totalorder %v711, 128
    %vm728 = vcmp.lt.s32.totalorder %v712, 128
    %vm729 = vcmp.lt.s32.totalorder %v713, 128
    %vm730 = vcmp.lt.s32.totalorder %v714, 128
    %v731 = vsel %vm715, 1, 0
    %v732 = vsel %vm716, 1, 0
    %v733 = vsel %vm717, 1, 0
    %v734 = vsel %vm718, 1, 0
    %v735 = vsel %vm719, 1, 0
    %v736 = vsel %vm720, 1, 0
    %v737 = vsel %vm721, 1, 0
    %v738 = vsel %vm722, 1, 0
    %v739 = vsel %vm723, 1, 0
    %v740 = vsel %vm724, 1, 0
    %v741 = vsel %vm725, 1, 0
    %v742 = vsel %vm726, 1, 0
    %v743 = vsel %vm727, 1, 0
    %v744 = vsel %vm728, 1, 0
    %v745 = vsel %vm729, 1, 0
    %v746 = vsel %vm730, 1, 0
    %v747 = vcvt.s32.f32 %v731
    %v748 = vcvt.s32.f32 %v732
    %v749 = vcvt.s32.f32 %v733
    %v750 = vcvt.s32.f32 %v734
    %v751 = vcvt.s32.f32 %v735
    %v752 = vcvt.s32.f32 %v736
    %v753 = vcvt.s32.f32 %v737
    %v754 = vcvt.s32.f32 %v738
    %v755 = vcvt.s32.f32 %v739
    %v756 = vcvt.s32.f32 %v740
    %v757 = vcvt.s32.f32 %v741
    %v758 = vcvt.s32.f32 %v742
    %v759 = vcvt.s32.f32 %v743
    %v760 = vcvt.s32.f32 %v744
    %v761 = vcvt.s32.f32 %v745
    %v762 = vcvt.s32.f32 %v746
    %763 = vst [vmem:[%s3] sm:$0xff] %v602
    %764 = vst [vmem:[%s3 + $0x8] sm:$0xff] %v607
    %765 = vst [vmem:[%s3 + $0x10] sm:$0xff] %v612
    %766 = vst [vmem:[%s3 + $0x18] sm:$0xff] %v617
    %767 = vst [vmem:[%s3 + $0x20] sm:$0xff] %v622
    %768 = vst [vmem:[%s3 + $0x28] sm:$0xff] %v627
    %769 = vst [vmem:[%s3 + $0x30] sm:$0xff] %v632
    %770 = vst [vmem:[%s3 + $0x38] sm:$0xff] %v637
    %771 = vst [vmem:[%s3 + $0x40] sm:$0xff] %v642
    %772 = vst [vmem:[%s3 + $0x48] sm:$0xff] %v647
    %773 = vst [vmem:[%s3 + $0x50] sm:$0xff] %v652
    %774 = vst [vmem:[%s3 + $0x58] sm:$0xff] %v657
    %775 = vst [vmem:[%s3 + $0x60] sm:$0xff] %v662
    %776 = vst [vmem:[%s3 + $0x68] sm:$0xff] %v667
    %777 = vst [vmem:[%s3 + $0x70] sm:$0xff] %v672
    %778 = vst [vmem:[%s3 + $0x78] sm:$0xff] %v677
    %v779 = vlaneseq
    %v780 = vshrl.u32 %v779, 7
    %v781 = vsub.s32 %v309, %v780
    %v782 = vrot.slane %v318, %v781
    %v783 = vadd.s32 %v309, 4294967288
    %v784 = vlaneseq
    %v785 = vshrl.u32 %v784, 7
    %v786 = vsub.s32 %v783, %v785
    %v787 = vrot.slane %v326, %v786
    %vm788 = vcmask 130112
    %v789 = vsel %vm788, %v787, %v782
    %v790 = vadd.s32 %v309, 4294967280
    %v791 = vlaneseq
    %v792 = vshrl.u32 %v791, 7
    %v793 = vsub.s32 %v790, %v792
    %v794 = vrot.slane %v334, %v793
    %vm795 = vcmask 195712
    %v796 = vsel %vm795, %v794, %v789
    %v797 = vadd.s32 %v309, 4294967272
    %v798 = vlaneseq
    %v799 = vshrl.u32 %v798, 7
    %v800 = vsub.s32 %v797, %v799
    %v801 = vrot.slane %v342, %v800
    %vm802 = vcmask 261312
    %v803 = vsel %vm802, %v801, %v796
    %v804 = vadd.s32 %v309, 4294967264
    %v805 = vlaneseq
    %v806 = vshrl.u32 %v805, 7
    %v807 = vsub.s32 %v804, %v806
    %v808 = vrot.slane %v350, %v807
    %vm809 = vcmask 326912
    %v810 = vsel %vm809, %v808, %v803
    %v811 = vadd.s32 %v309, 4294967256
    %v812 = vlaneseq
    %v813 = vshrl.u32 %v812, 7
    %v814 = vsub.s32 %v811, %v813
    %v815 = vrot.slane %v358, %v814
    %vm816 = vcmask 392512
    %v817 = vsel %vm816, %v815, %v810
    %v818 = vadd.s32 %v309, 4294967248
    %v819 = vlaneseq
    %v820 = vshrl.u32 %v819, 7
    %v821 = vsub.s32 %v818, %v820
    %v822 = vrot.slane %v366, %v821
    %vm823 = vcmask 458112
    %v824 = vsel %vm823, %v822, %v817
    %v825 = vadd.s32 %v309, 4294967240
    %v826 = vlaneseq
    %v827 = vshrl.u32 %v826, 7
    %v828 = vsub.s32 %v825, %v827
    %v829 = vrot.slane %v374, %v828
    %vm830 = vcmask 523712
    %v831 = vsel %vm830, %v829, %v824
    %v832 = vadd.s32 %v309, 4294967232
    %v833 = vlaneseq
    %v834 = vshrl.u32 %v833, 7
    %v835 = vsub.s32 %v832, %v834
    %v836 = vrot.slane %v382, %v835
    %vm837 = vcmask 589312
    %v838 = vsel %vm837, %v836, %v831
    %v839 = vadd.s32 %v309, 4294967224
    %v840 = vlaneseq
    %v841 = vshrl.u32 %v840, 7
    %v842 = vsub.s32 %v839, %v841
    %v843 = vrot.slane %v390, %v842
    %vm844 = vcmask 654912
    %v845 = vsel %vm844, %v843, %v838
    %v846 = vadd.s32 %v309, 4294967216
    %v847 = vlaneseq
    %v848 = vshrl.u32 %v847, 7
    %v849 = vsub.s32 %v846, %v848
    %v850 = vrot.slane %v398, %v849
    %vm851 = vcmask 720512
    %v852 = vsel %vm851, %v850, %v845
    %v853 = vadd.s32 %v309, 4294967208
    %v854 = vlaneseq
    %v855 = vshrl.u32 %v854, 7
    %v856 = vsub.s32 %v853, %v855
    %v857 = vrot.slane %v406, %v856
    %vm858 = vcmask 786112
    %v859 = vsel %vm858, %v857, %v852
    %v860 = vadd.s32 %v309, 4294967200
    %v861 = vlaneseq
    %v862 = vshrl.u32 %v861, 7
    %v863 = vsub.s32 %v860, %v862
    %v864 = vrot.slane %v414, %v863
    %vm865 = vcmask 851712
    %v866 = vsel %vm865, %v864, %v859
    %v867 = vadd.s32 %v309, 4294967192
    %v868 = vlaneseq
    %v869 = vshrl.u32 %v868, 7
    %v870 = vsub.s32 %v867, %v869
    %v871 = vrot.slane %v422, %v870
    %vm872 = vcmask 917312
    %v873 = vsel %vm872, %v871, %v866
    %v874 = vadd.s32 %v309, 4294967184
    %v875 = vlaneseq
    %v876 = vshrl.u32 %v875, 7
    %v877 = vsub.s32 %v874, %v876
    %v878 = vrot.slane %v430, %v877
    %vm879 = vcmask 982912
    %v880 = vsel %vm879, %v878, %v873
    %v881 = vadd.s32 %v309, 4294967176
    %v882 = vlaneseq
    %v883 = vshrl.u32 %v882, 7
    %v884 = vsub.s32 %v881, %v883
    %v885 = vrot.slane %v438, %v884
    %vm886 = vcmask 1048512
    %v887 = vsel %vm886, %v885, %v880
    %888 = vst [vmem:[%s4] sm:$0x1] %v887
    %v889 = vmul.f32 %v503, %v747
    %v890 = vmul.f32 %v504, %v747
    %v891 = vmul.f32 %v505, %v748
    %v892 = vmul.f32 %v506, %v748
    %v893 = vmul.f32 %v507, %v749
    %v894 = vmul.f32 %v508, %v749
    %v895 = vmul.f32 %v509, %v750
    %v896 = vmul.f32 %v510, %v750
    %v897 = vmul.f32 %v511, %v751
    %v898 = vmul.f32 %v512, %v751
    %v899 = vmul.f32 %v513, %v752
    %v900 = vmul.f32 %v514, %v752
    %v901 = vmul.f32 %v515, %v753
    %v902 = vmul.f32 %v516, %v753
    %v903 = vmul.f32 %v517, %v754
    %v904 = vmul.f32 %v518, %v754
    %v905 = vmul.f32 %v519, %v755
    %v906 = vmul.f32 %v520, %v755
    %v907 = vmul.f32 %v521, %v756
    %v908 = vmul.f32 %v522, %v756
    %v909 = vmul.f32 %v523, %v757
    %v910 = vmul.f32 %v524, %v757
    %v911 = vmul.f32 %v525, %v758
    %v912 = vmul.f32 %v526, %v758
    %v913 = vmul.f32 %v527, %v759
    %v914 = vmul.f32 %v528, %v759
    %v915 = vmul.f32 %v529, %v760
    %v916 = vmul.f32 %v530, %v760
    %v917 = vmul.f32 %v531, %v761
    %v918 = vmul.f32 %v532, %v761
    %v919 = vmul.f32 %v533, %v762
    %v920 = vmul.f32 %v534, %v762
    %v921 = vadd.f32 %v889, %v891
    %v922 = vadd.f32 %v921, %v893
    %v923 = vadd.f32 %v922, %v895
    %v924 = vadd.f32 %v923, %v897
    %v925 = vadd.f32 %v924, %v899
    %v926 = vadd.f32 %v925, %v901
    %v927 = vadd.f32 %v926, %v903
    %v928 = vadd.f32 %v927, %v905
    %v929 = vadd.f32 %v928, %v907
    %v930 = vadd.f32 %v929, %v909
    %v931 = vadd.f32 %v930, %v911
    %v932 = vadd.f32 %v931, %v913
    %v933 = vadd.f32 %v932, %v915
    %v934 = vadd.f32 %v933, %v917
    %v935 = vadd.f32 %v934, %v919
    %v936 = vrot.slane %v935, 4
    %v937 = vadd.f32 %v935, %v936
    %v938 = vrot.slane %v937, 2
    %v939 = vadd.f32 %v937, %v938
    %v940 = vrot.slane %v939, 1
    %v941 = vadd.f32 %v939, %v940
    %v942 = vadd.f32 %v890, %v892
    %v943 = vadd.f32 %v942, %v894
    %v944 = vadd.f32 %v943, %v896
    %v945 = vadd.f32 %v944, %v898
    %v946 = vadd.f32 %v945, %v900
    %v947 = vadd.f32 %v946, %v902
    %v948 = vadd.f32 %v947, %v904
    %v949 = vadd.f32 %v948, %v906
    %v950 = vadd.f32 %v949, %v908
    %v951 = vadd.f32 %v950, %v910
    %v952 = vadd.f32 %v951, %v912
    %v953 = vadd.f32 %v952, %v914
    %v954 = vadd.f32 %v953, %v916
    %v955 = vadd.f32 %v954, %v918
    %v956 = vadd.f32 %v955, %v920
    %v957 = vrot.slane %v956, 4
    %v958 = vadd.f32 %v956, %v957
    %v959 = vrot.slane %v958, 2
    %v960 = vadd.f32 %v958, %v959
    %v961 = vrot.slane %v960, 1
    %v962 = vadd.f32 %v960, %v961
    %v965 = vcombine.low %v941, %v962
    %v967 = vunpack.c.l.s4 1966171168
    %v968 = vunpack.c.0.s8 %v967
    %v969 = vlaneseq
    %v970 = vshrl.u32 %v969, 7
    %v971 = vsub.s32 %v968, %v970
    %v972 = vrot.slane %v965, %v971
    %v974 = vunpack.c.l.s4 1966171168
    %v975 = vunpack.c.0.s8 %v974
    %v976 = vlaneseq
    %v977 = vshrl.u32 %v976, 7
    %v978 = vsub.s32 %v975, %v977
    %v979 = vrot.slane %v972, %v978
    %v981 = vlaneseq
    %vm982 = vcmp.ge.s32.totalorder %v981, 0
    %vm983 = vcmp.lt.s32.totalorder %v981, 256
    %vm984 = vmand %vm982, %vm983
    %985 = vst.msk [vmem:[%s5] sm:$0x3] %vm984, %v979
    %v986 = vsub.f32 %v602, %v47
    %v987 = vsub.f32 %v607, %v48
    %v988 = vsub.f32 %v612, %v49
    %v989 = vsub.f32 %v617, %v50
    %v990 = vsub.f32 %v622, %v51
    %v991 = vsub.f32 %v627, %v52
    %v992 = vsub.f32 %v632, %v53
    %v993 = vsub.f32 %v637, %v54
    %v994 = vsub.f32 %v642, %v55
    %v995 = vsub.f32 %v647, %v56
    %v996 = vsub.f32 %v652, %v57
    %v997 = vsub.f32 %v657, %v58
    %v998 = vsub.f32 %v662, %v59
    %v999 = vsub.f32 %v667, %v60
    %v1000 = vsub.f32 %v672, %v61
    %v1001 = vsub.f32 %v677, %v62
    %v1002 = vmul.f32 %v986, %v986
    %v1003 = vmul.f32 %v987, %v987
    %v1004 = vmul.f32 %v988, %v988
    %v1005 = vmul.f32 %v989, %v989
    %v1006 = vmul.f32 %v990, %v990
    %v1007 = vmul.f32 %v991, %v991
    %v1008 = vmul.f32 %v992, %v992
    %v1009 = vmul.f32 %v993, %v993
    %v1010 = vmul.f32 %v994, %v994
    %v1011 = vmul.f32 %v995, %v995
    %v1012 = vmul.f32 %v996, %v996
    %v1013 = vmul.f32 %v997, %v997
    %v1014 = vmul.f32 %v998, %v998
    %v1015 = vmul.f32 %v999, %v999
    %v1016 = vmul.f32 %v1000, %v1000
    %v1017 = vmul.f32 %v1001, %v1001
    %v1018 = vmul.f32 %v1002, %v747
    %v1019 = vmul.f32 %v1003, %v748
    %v1020 = vmul.f32 %v1004, %v749
    %v1021 = vmul.f32 %v1005, %v750
    %v1022 = vmul.f32 %v1006, %v751
    %v1023 = vmul.f32 %v1007, %v752
    %v1024 = vmul.f32 %v1008, %v753
    %v1025 = vmul.f32 %v1009, %v754
    %v1026 = vmul.f32 %v1010, %v755
    %v1027 = vmul.f32 %v1011, %v756
    %v1028 = vmul.f32 %v1012, %v757
    %v1029 = vmul.f32 %v1013, %v758
    %v1030 = vmul.f32 %v1014, %v759
    %v1031 = vmul.f32 %v1015, %v760
    %v1032 = vmul.f32 %v1016, %v761
    %v1033 = vmul.f32 %v1017, %v762
    %v1034 = vadd.f32 %v1018, %v1019
    %v1035 = vadd.f32 %v1034, %v1020
    %v1036 = vadd.f32 %v1035, %v1021
    %v1037 = vadd.f32 %v1036, %v1022
    %v1038 = vadd.f32 %v1037, %v1023
    %v1039 = vadd.f32 %v1038, %v1024
    %v1040 = vadd.f32 %v1039, %v1025
    %v1041 = vadd.f32 %v1040, %v1026
    %v1042 = vadd.f32 %v1041, %v1027
    %v1043 = vadd.f32 %v1042, %v1028
    %v1044 = vadd.f32 %v1043, %v1029
    %v1045 = vadd.f32 %v1044, %v1030
    %v1046 = vadd.f32 %v1045, %v1031
    %v1047 = vadd.f32 %v1046, %v1032
    %v1048 = vadd.f32 %v1047, %v1033
    %1049 = vadd.xlane.f32.xlu0 %v1048
    %v1050 = vpop.xlane.xlu0 %1049
    %v1051 = vrot.slane %v1050, 4
    %v1052 = vadd.f32 %v1050, %v1051
    %v1053 = vrot.slane %v1052, 2
    %v1054 = vadd.f32 %v1052, %v1053
    %v1055 = vrot.slane %v1054, 1
    %v1056 = vadd.f32 %v1054, %v1055
    %s1057 = vtos %v1056
    %v1058 = vstv %s1057
    %1059 = vst [vmem:[%s6] sm:$0x1] %v1058
    // Predicated region
    $region22: #{a_call__.1} parent=1 // pred_check
      _
    $region23: #{a_call__.1} parent=1 // pred_check_branch
      %1061 = sbr.rel (0) target = $region25
    $region24: #{a_call__.1} parent=1 // pred_region
      _
    $region25: #{a_call__.1} parent=1 // pred_fallthru
      _
    // Predicated region
    $region26: #{a_call__.1} parent=1 // pred_check
      _
    $region27: #{a_call__.1} parent=1 // pred_check_branch
      %1063 = sbr.rel (0) target = $region29
    $region28: #{a_call__.1} parent=1 // pred_region
      _
    $region29: #{a_call__.1} parent=1 // pred_fallthru
      _
    // Predicated region
    $region30: #{a_call__.1} parent=1 // pred_check
      _
    $region31: #{a_call__.1} parent=1 // pred_check_branch
      %1065 = sbr.rel (0) target = $region33
    $region32: #{a_call__.1} parent=1 // pred_region
      _
    $region33: #{a_call__.1} parent=1 // pred_fallthru
      _
    // Predicated region
    $region34: #{a_call__.1} parent=1 // pred_check
      _
    $region35: #{a_call__.1} parent=1 // pred_check_branch
      %1067 = sbr.rel (0) target = $region37
    $region36: #{a_call__.1} parent=1 // pred_region
      _
    $region37: #{a_call__.1} parent=1 // pred_fallthru
      _
    // Predicated region
    $region38: #{a_call__.1} parent=1 // pred_check
      _
    $region39: #{a_call__.1} parent=1 // pred_check_branch
      %1069 = sbr.rel (0) target = $region41
    $region40: #{a_call__.1} parent=1 // pred_region
      _
    $region41: #{a_call__.1} parent=1 // pred_fallthru
      _
    // Predicated region
    $region42: #{a_call__.1} parent=1 // pred_check
      _
    $region43: #{a_call__.1} parent=1 // pred_check_branch
      %1071 = sbr.rel (0) target = $region45
    $region44: #{a_call__.1} parent=1 // pred_region
      _
    $region45: #{a_call__.1} parent=1 // pred_fallthru
      _
    // Predicated region
    $region46: #{a_call__.1} parent=1 // pred_check
      _
    $region47: #{a_call__.1} parent=1 // pred_check_branch
      %1073 = sbr.rel (0) target = $region49
    $region48: #{a_call__.1} parent=1 // pred_region
      _
    $region49: #{a_call__.1} parent=1 // pred_fallthru
      _
    // Predicated region
    $region50: #{a_call__.1} parent=1 // pred_check
      _
    $region51: #{a_call__.1} parent=1 // pred_check_branch
      %1075 = sbr.rel (0) target = $region53
    $region52: #{a_call__.1} parent=1 // pred_region
      _
    $region53: #{a_call__.1} parent=1 // pred_fallthru
      _
    %1076 = vsyncpa [#allocation3], 1
    %1077 = vsyncpa [#allocation5], 1

</llo_original>
